<compile_context>
chip_gen: v7x
topology: tpu7x:2x2x1
jax: 0.10.0
libtpu: 0.0.40
codegen_flags: <defaults>
</compile_context>

<pallas_src>
import functools
import math

import jax
import jax.numpy as jnp
from jax.experimental import pallas as pl
from jax.experimental.pallas import tpu as pltpu


# ---------------------------------------------------------------------------
# Kernel
# ---------------------------------------------------------------------------
def transformer_block_kernel(x_ref, wf_ref, bf_ref, w2_ref, b2_ref, o_ref, *, d_model):
    bblk, n, d_points = x_ref.shape
    mp = wf_ref.shape[1] // 3          # lane-aligned (multiple of 128) padded d_model
    rows = bblk * n

    pre = x_ref[...]                                   # (bblk, N, P) f32
    pre2d = pre.reshape(rows, d_points)                # leading-dim collapse only (no lane move)

    # Folded fc1 ∘ {w_qs, w_ks, w_vs}: one wide MXU matmul, bf16 inputs, f32 accumulation.
    qkv = jnp.dot(pre2d.astype(jnp.bfloat16), wf_ref[...],
                  preferred_element_type=jnp.float32) + bf_ref[...]    # (rows, 3*Mp) f32

    # Lane-aligned slices (offsets are multiples of 128) -> no relayout copies.
    q = qkv[:, :mp].reshape(bblk, n, mp).astype(jnp.bfloat16)
    k = qkv[:, mp:2 * mp].reshape(bblk, n, mp).astype(jnp.bfloat16)
    v = qkv[:, 2 * mp:].reshape(bblk, n, mp).astype(jnp.bfloat16)

    # Scaled dot-product attention; contraction over d (no explicit k transpose).
    # Scale uses the *unpadded* d_model to match the reference module.
    scale = 1.0 / math.sqrt(d_model)
    s = jnp.einsum('bqd,bkd->bqk', q, k,
                   preferred_element_type=jnp.float32) * scale          # (bblk, N, N) f32
    s = s - jnp.max(s, axis=-1, keepdims=True)
    p = jnp.exp(s)                                                      # softmax stats in f32
    denom = jnp.sum(p, axis=-1, keepdims=True)
    attn = (p * pl.reciprocal(denom, approx=True)).astype(jnp.bfloat16)

    res = jnp.einsum('bqk,bkd->bqd', attn, v,
                     preferred_element_type=jnp.float32)                # (bblk, N, Mp)

    # fc2 + residual (residual add kept in f32; padded rows of w2 are zero).
    out2d = jnp.dot(res.reshape(rows, mp).astype(jnp.bfloat16), w2_ref[...],
                    preferred_element_type=jnp.float32) + b2_ref[...] + pre2d
    o_ref[...] = out2d.reshape(bblk, n, d_points).astype(o_ref.dtype)


# ---------------------------------------------------------------------------
# Wrapper-side sizing helpers (lane-padding aware, per review correctness note)
# ---------------------------------------------------------------------------
def _lane(d):
    return ((d + 127) // 128) * 128


def _sub(d):
    return ((d + 7) // 8) * 8


def _per_batch_elem_vmem_bytes(N, P, Mp):
    """Rough per-batch-element VMEM working set, including lane/sublane padding."""
    n8, p_l, n_l, m_l = _sub(N), _lane(P), _lane(N), _lane(Mp)
    io = 2 * 2 * n8 * p_l * 4                # in + out blocks, double-buffered, lane-padded
    qkv = n8 * 3 * m_l * (4 + 2)             # f32 qkv + bf16 q/k/v copies
    attn = n8 * n_l * (4 + 4 + 2)            # s (f32), p (f32), attn (bf16)
    res = n8 * m_l * (4 + 2)                 # res f32 + bf16 copy
    outb = n8 * p_l * 4 * 2                  # out2d + residual temp
    return io + qkv + attn + res + outb


def _weight_vmem_bytes(P, Mp):
    wf = _sub(P) * _lane(3 * Mp) * 2         # folded qkv weight, bf16
    w2 = _sub(Mp) * _lane(P) * 2             # fc2 weight, bf16
    b = (_sub(1) * _lane(3 * Mp) + _sub(1) * _lane(P)) * 4
    return 2 * (wf + w2 + b)                 # default pipeline double-buffers constants


def _vmem_capacity_bytes():
    try:
        return int(pltpu.get_tpu_info().vmem_capacity_bytes)
    except Exception:
        return 64 * 1024 * 1024              # v7x per-TensorCore size: safe lower bound


def _choose_bblk(B, N, cap_elems):
    """Pick batch-block size from the VMEM-derived element cap."""
    cap_elems = max(1, cap_elems)
    if cap_elems >= B:
        # Whole batch fits in one step. If B splits cleanly into two full tiles with
        # enough rows, use two grid steps so v7x's second TensorCore gets work via the
        # "parallel" axis (no effect on v5e/v6e correctness or perf).
        if B % 16 == 0 and (B // 2) * N >= 512:
            return B // 2
        return B
    # grid > 1: the tiled batch dim of the block must be a multiple of 8 ((8,128) rule).
    return max(8, (cap_elems // 8) * 8)


# ---------------------------------------------------------------------------
# One-time weight preparation (fold fc1 into qkv, pad, cast) — per review, keep this
# outside the per-call path so the pallas_call is the only per-step work.
# ---------------------------------------------------------------------------
def prepare_block_params(params):
    w1 = params["w1"].astype(jnp.float32)          # (P, M)
    b1 = params["b1"].astype(jnp.float32)          # (1, M)
    P, M = w1.shape
    Mp = _lane(M)                                  # pad d_model so qkv slices are lane-aligned

    def fold(w):                                   # w: (M, M), stored (in, out)
        wf = w1 @ w.astype(jnp.float32)            # (P, M)  -- fold done in f32
        bf = b1 @ w.astype(jnp.float32)            # (1, M)
        pad = [(0, 0), (0, Mp - M)]
        return jnp.pad(wf, pad), jnp.pad(bf, pad)

    wq, bq = fold(params["wq"])
    wk, bk = fold(params["wk"])
    wv, bv = fold(params["wv"])
    wfold = jnp.concatenate([wq, wk, wv], axis=1).astype(jnp.bfloat16)        # (P, 3*Mp)
    bfold = jnp.concatenate([bq, bk, bv], axis=1).astype(jnp.float32)         # (1, 3*Mp)
    w2 = jnp.pad(params["w2"].astype(jnp.float32),
                 [(0, Mp - M), (0, 0)]).astype(jnp.bfloat16)                  # (Mp, P)
    b2 = params["b2"].astype(jnp.float32).reshape(1, -1)                      # (1, P)
    return {"wfold": wfold, "bfold": bfold, "w2": w2, "b2": b2,
            "d_points": P, "d_model": M, "d_model_pad": Mp}


# ---------------------------------------------------------------------------
# Pallas call wrapper
# ---------------------------------------------------------------------------
def transformer_block(features, prepared):
    """features: (B, N, d_points) float32; prepared: output of prepare_block_params."""
    B, N, P = features.shape
    assert P == prepared["d_points"]
    M, Mp = prepared["d_model"], prepared["d_model_pad"]

    vmem_cap = _vmem_capacity_bytes()
    headroom = 8 * 1024 * 1024
    budget = max(8 * 1024 * 1024, min(vmem_cap // 2, vmem_cap - headroom))

    per_elem = _per_batch_elem_vmem_bytes(N, P, Mp)
    w_bytes = _weight_vmem_bytes(P, Mp)
    bblk = _choose_bblk(B, N, (budget - w_bytes) // per_elem)

    # cdiv-based grid with batch padding (awkward B no longer degrades to bblk=1).
    b_pad = -(-B // bblk) * bblk
    x = features if b_pad == B else jnp.pad(features, ((0, b_pad - B), (0, 0), (0, 0)))
    grid = (b_pad // bblk,)

    cp_kwargs = dict(dimension_semantics=("parallel",))
    est = w_bytes + bblk * per_elem
    if est > 16 * 1024 * 1024:
        # Raise the scoped limit only when needed and never above physical VMEM (v7x: 64 MiB).
        cp_kwargs["vmem_limit_bytes"] = int(min(max(int(1.3 * est), 32 * 1024 * 1024),
                                                vmem_cap - headroom))

    kernel = functools.partial(transformer_block_kernel, d_model=M)
    const = lambda shape: pl.BlockSpec(shape, lambda b: (0,) * len(shape))

    out = pl.pallas_call(
        kernel,
        out_shape=jax.ShapeDtypeStruct((b_pad, N, P), features.dtype),
        grid_spec=pltpu.PrefetchScalarGridSpec(
            num_scalar_prefetch=0,
            grid=grid,
            in_specs=[
                pl.BlockSpec((bblk, N, P), lambda b: (b, 0, 0)),   # features
                const((P, 3 * Mp)),                                # folded fc1∘qkv weight (bf16)
                const((1, 3 * Mp)),                                # folded bias (f32)
                const((Mp, P)),                                    # fc2 weight (bf16, zero-padded rows)
                const((1, P)),                                     # fc2 bias (f32)
            ],
            out_specs=pl.BlockSpec((bblk, N, P), lambda b: (b, 0, 0)),
        ),
        compiler_params=pltpu.CompilerParams(**cp_kwargs),
    )(x, prepared["wfold"], prepared["bfold"], prepared["w2"], prepared["b2"])
    return out[:B] if b_pad != B else out


# ---------------------------------------------------------------------------
# Synthetic params + pure-JAX reference
# ---------------------------------------------------------------------------
def init_params(key, d_points, d_model):
    """Deterministic synthetic init. Weights stored as (in_dim, out_dim)."""
    keys = jax.random.split(key, 8)
    s = 0.1
    return {
        "w1": s * jax.random.normal(keys[0], (d_points, d_model), jnp.float32),
        "b1": s * jax.random.normal(keys[1], (1, d_model), jnp.float32),
        "wq": s * jax.random.normal(keys[2], (d_model, d_model), jnp.float32),
        "wk": s * jax.random.normal(keys[3], (d_model, d_model), jnp.float32),
        "wv": s * jax.random.normal(keys[4], (d_model, d_model), jnp.float32),
        "w2": s * jax.random.normal(keys[5], (d_model, d_points), jnp.float32),
        "b2": s * jax.random.normal(keys[6], (1, d_points), jnp.float32),
        # NOTE: fc_gamma parameters omitted — unused in the reference forward().
    }


def reference_forward(features, p):
    x = features @ p["w1"] + p["b1"]
    q, k, v = x @ p["wq"], x @ p["wk"], x @ p["wv"]
    attn = jnp.einsum("bnd,bmd->bnm", q, k) / jnp.sqrt(jnp.float32(k.shape[-1]))
    attn = jax.nn.softmax(attn, axis=-1)
    res = jnp.einsum("bnm,bmd->bnd", attn, v)
    return res @ p["w2"] + p["b2"] + features


if __name__ == "__main__":
    B, N, d_points, d_model = 2, 16, 4, 32
    key = jax.random.PRNGKey(0)
    k_feat, k_par = jax.random.split(key)
    features = jax.random.normal(k_feat, (B, N, d_points), jnp.float32)
    params = init_params(k_par, d_points, d_model)

    prepared = prepare_block_params(params)          # one-time weight fold/pad/cast
    out = jax.block_until_ready(transformer_block(features, prepared))
    ref = reference_forward(features, params)

    assert out.shape == (B, N, d_points)
    max_err = float(jnp.max(jnp.abs(out - ref)))
    # Tolerance loosened vs. the f32 reference: MXU operands are bf16 (folded weight is
    # computed in f32 then cast) and the softmax denominator uses the approx reciprocal.
    assert jnp.allclose(out, ref, atol=2e-2, rtol=2e-2), \
        f"mismatch vs JAX reference (max abs err {max_err})"

    print("KERNEL_OK")
</pallas_src>

<mosaic_0001>
module attributes {stable_mosaic.version = 11 : i64} {
  func.func @transformer_block_kernel(%arg0: i32, %arg1: memref<2x16x4xf32, #tpu.memory_space<vmem>>, %arg2: memref<4x384xbf16, #tpu.memory_space<vmem>>, %arg3: memref<1x384xf32, #tpu.memory_space<vmem>>, %arg4: memref<128x4xbf16, #tpu.memory_space<vmem>>, %arg5: memref<1x4xf32, #tpu.memory_space<vmem>>, %arg6: memref<2x16x4xf32, #tpu.memory_space<vmem>>) attributes {dimension_semantics = [#tpu.dimension_semantics<parallel>], iteration_bounds = array<i64: 1>, scalar_prefetch = 0 : i64, scratch_operands = 0 : i64, tpu.core_type = #tpu.core_type<tc>, window_params = [{transform_indices = @transform_0, window_bounds = array<i64: 2, 16, 4>}, {pipeline_mode = #tpu.pipeline_mode<synchronous>, transform_indices = @transform_1, window_bounds = array<i64: 4, 384>}, {pipeline_mode = #tpu.pipeline_mode<synchronous>, transform_indices = @transform_2, window_bounds = array<i64: 1, 384>}, {pipeline_mode = #tpu.pipeline_mode<synchronous>, transform_indices = @transform_3, window_bounds = array<i64: 128, 4>}, {pipeline_mode = #tpu.pipeline_mode<synchronous>, transform_indices = @transform_4, window_bounds = array<i64: 1, 4>}, {transform_indices = @transform_5, window_bounds = array<i64: 2, 16, 4>}]} {
    %c0 = arith.constant 0 : index
    %c0_0 = arith.constant 0 : index
    %c0_1 = arith.constant 0 : index
    %0 = vector.load %arg1[%c0, %c0_0, %c0_1] : memref<2x16x4xf32, #tpu.memory_space<vmem>>, vector<2x16x4xf32>
    %1 = vector.shape_cast %0 : vector<2x16x4xf32> to vector<32x4xf32>
    %2 = arith.truncf %1 : vector<32x4xf32> to vector<32x4xbf16>
    %c0_2 = arith.constant 0 : index
    %c0_3 = arith.constant 0 : index
    %3 = vector.load %arg2[%c0_2, %c0_3] : memref<4x384xbf16, #tpu.memory_space<vmem>>, vector<4x384xbf16>
    %cst = arith.constant dense<0.000000e+00> : vector<32x384xf32>
    %4 = tpu.matmul %2, %3, %cst {dimension_numbers = #tpu.dot_dimension_numbers<[1], [0], [0], [1], [0, 0, 1, 1], [], []>} : vector<32x4xbf16>, vector<4x384xbf16>, vector<32x384xf32> -> vector<32x384xf32>
    %c0_4 = arith.constant 0 : index
    %c0_5 = arith.constant 0 : index
    %5 = vector.load %arg3[%c0_4, %c0_5] : memref<1x384xf32, #tpu.memory_space<vmem>>, vector<1x384xf32>
    %6 = vector.broadcast %5 : vector<1x384xf32> to vector<32x384xf32>
    %7 = arith.addf %4, %6 : vector<32x384xf32>
    %8 = vector.extract_strided_slice %7 {offsets = [0, 0], sizes = [32, 128], strides = [1, 1]} : vector<32x384xf32> to vector<32x128xf32>
    %9 = vector.shape_cast %8 : vector<32x128xf32> to vector<2x16x128xf32>
    %10 = arith.truncf %9 : vector<2x16x128xf32> to vector<2x16x128xbf16>
    %11 = vector.extract_strided_slice %7 {offsets = [0, 128], sizes = [32, 128], strides = [1, 1]} : vector<32x384xf32> to vector<32x128xf32>
    %12 = vector.shape_cast %11 : vector<32x128xf32> to vector<2x16x128xf32>
    %13 = arith.truncf %12 : vector<2x16x128xf32> to vector<2x16x128xbf16>
    %14 = vector.extract_strided_slice %7 {offsets = [0, 256], sizes = [32, 128], strides = [1, 1]} : vector<32x384xf32> to vector<32x128xf32>
    %15 = vector.shape_cast %14 : vector<32x128xf32> to vector<2x16x128xf32>
    %16 = arith.truncf %15 : vector<2x16x128xf32> to vector<2x16x128xbf16>
    "tpu.trace_start"() <{level = 10 : i32, message = "bqd,bkd->bqk"}> : () -> ()
    %cst_6 = arith.constant dense<0.000000e+00> : vector<2x16x16xf32>
    %17 = tpu.matmul %10, %13, %cst_6 {dimension_numbers = #tpu.dot_dimension_numbers<[2], [2], [1], [1], [0, 0, 0, 1, 1, 1], [0], [0]>} : vector<2x16x128xbf16>, vector<2x16x128xbf16>, vector<2x16x16xf32> -> vector<2x16x16xf32>
    "tpu.trace_stop"() : () -> ()
    %cst_7 = arith.constant 0.176776692 : f32
    %18 = vector.broadcast %cst_7 : f32 to vector<2x16x16xf32>
    %19 = arith.mulf %17, %18 : vector<2x16x16xf32>
    %cst_8 = arith.constant dense<0xFF800000> : vector<2x16xf32>
    %20 = vector.multi_reduction <maximumf>, %19, %cst_8 [2] : vector<2x16x16xf32> to vector<2x16xf32>
    %21 = vector.shape_cast %20 : vector<2x16xf32> to vector<2x16x1xf32>
    %22 = vector.broadcast %21 : vector<2x16x1xf32> to vector<2x16x16xf32>
    %23 = arith.subf %19, %22 : vector<2x16x16xf32>
    %24 = math.exp %23 : vector<2x16x16xf32>
    %cst_9 = arith.constant dense<0.000000e+00> : vector<2x16xf32>
    %25 = vector.multi_reduction <add>, %24, %cst_9 [2] : vector<2x16x16xf32> to vector<2x16xf32>
    %26 = vector.shape_cast %25 : vector<2x16xf32> to vector<2x16x1xf32>
    %27 = tpu.reciprocal %26 {approx = true} : vector<2x16x1xf32> -> vector<2x16x1xf32>
    %28 = vector.broadcast %27 : vector<2x16x1xf32> to vector<2x16x16xf32>
    %29 = arith.mulf %24, %28 : vector<2x16x16xf32>
    %30 = arith.truncf %29 : vector<2x16x16xf32> to vector<2x16x16xbf16>
    "tpu.trace_start"() <{level = 10 : i32, message = "bqk,bkd->bqd"}> : () -> ()
    %cst_10 = arith.constant dense<0.000000e+00> : vector<2x16x128xf32>
    %31 = tpu.matmul %30, %16, %cst_10 {dimension_numbers = #tpu.dot_dimension_numbers<[2], [1], [1], [2], [0, 0, 0, 1, 1, 2], [0], [0]>} : vector<2x16x16xbf16>, vector<2x16x128xbf16>, vector<2x16x128xf32> -> vector<2x16x128xf32>
    "tpu.trace_stop"() : () -> ()
    %32 = vector.shape_cast %31 : vector<2x16x128xf32> to vector<32x128xf32>
    %33 = arith.truncf %32 : vector<32x128xf32> to vector<32x128xbf16>
    %c0_11 = arith.constant 0 : index
    %c0_12 = arith.constant 0 : index
    %34 = vector.load %arg4[%c0_11, %c0_12] : memref<128x4xbf16, #tpu.memory_space<vmem>>, vector<128x4xbf16>
    %cst_13 = arith.constant dense<0.000000e+00> : vector<32x4xf32>
    %35 = tpu.matmul %33, %34, %cst_13 {dimension_numbers = #tpu.dot_dimension_numbers<[1], [0], [0], [1], [0, 0, 1, 1], [], []>} : vector<32x128xbf16>, vector<128x4xbf16>, vector<32x4xf32> -> vector<32x4xf32>
    %c0_14 = arith.constant 0 : index
    %c0_15 = arith.constant 0 : index
    %36 = vector.load %arg5[%c0_14, %c0_15] : memref<1x4xf32, #tpu.memory_space<vmem>>, vector<1x4xf32>
    %37 = vector.broadcast %36 : vector<1x4xf32> to vector<32x4xf32>
    %38 = arith.addf %35, %37 : vector<32x4xf32>
    %39 = arith.addf %38, %1 : vector<32x4xf32>
    %40 = vector.shape_cast %39 : vector<32x4xf32> to vector<2x16x4xf32>
    %c0_16 = arith.constant 0 : index
    %c0_17 = arith.constant 0 : index
    %c0_18 = arith.constant 0 : index
    %41 = vector.load %arg6[%c0_16, %c0_17, %c0_18] : memref<2x16x4xf32, #tpu.memory_space<vmem>>, vector<2x16x4xf32>
    tpu.vector_store %arg6[%c0_16, %c0_17, %c0_18], %40 {strides = array<i32>} : memref<2x16x4xf32, #tpu.memory_space<vmem>>, vector<2x16x4xf32>,
    return
  }
  func.func @transform_0(%arg0: i32) -> (i32, i32, i32) {
    %c0_i32 = arith.constant 0 : i32
    %c0_i32_0 = arith.constant 0 : i32
    %c0_i32_1 = arith.constant 0 : i32
    return %arg0, %c0_i32, %c0_i32_0 : i32, i32, i32
  }
  func.func @transform_1(%arg0: i32) -> (i32, i32) {
    %c0_i32 = arith.constant 0 : i32
    %c0_i32_0 = arith.constant 0 : i32
    %c0_i32_1 = arith.constant 0 : i32
    return %c0_i32, %c0_i32_0 : i32, i32
  }
  func.func @transform_2(%arg0: i32) -> (i32, i32) {
    %c0_i32 = arith.constant 0 : i32
    %c0_i32_0 = arith.constant 0 : i32
    %c0_i32_1 = arith.constant 0 : i32
    return %c0_i32, %c0_i32_0 : i32, i32
  }
  func.func @transform_3(%arg0: i32) -> (i32, i32) {
    %c0_i32 = arith.constant 0 : i32
    %c0_i32_0 = arith.constant 0 : i32
    %c0_i32_1 = arith.constant 0 : i32
    return %c0_i32, %c0_i32_0 : i32, i32
  }
  func.func @transform_4(%arg0: i32) -> (i32, i32) {
    %c0_i32 = arith.constant 0 : i32
    %c0_i32_0 = arith.constant 0 : i32
    %c0_i32_1 = arith.constant 0 : i32
    return %c0_i32, %c0_i32_0 : i32, i32
  }
  func.func @transform_5(%arg0: i32) -> (i32, i32, i32) {
    %c0_i32 = arith.constant 0 : i32
    %c0_i32_0 = arith.constant 0 : i32
    %c0_i32_1 = arith.constant 0 : i32
    return %arg0, %c0_i32, %c0_i32_0 : i32, i32, i32
  }
}

</mosaic_0001>

<llo_original>
// kernel: tpu_custom_call.1
$region0: #{tpu_custom_call.1}
  #allocation0 [shape = 'u32[]', space=smem, size = 0x4, offset = 0x4, fixed_abs, tag = 'smem constant byte address 0x4 - core index']
  #allocation1 [shape = 'u32[144,128]{1,0:T(1,128)}', space=vmem, size = 0x12000, scoped, tag = 'internal scratch']
  %s0 = inlined_call_operand.vmem [shape: f32[2,16,4], index: 0, kind: input, shape index: {}]
  %s1 = inlined_call_operand.vmem [shape: bf16[4,384], index: 1, kind: input, shape index: {}]
  %s2 = inlined_call_operand.vmem [shape: f32[1,384], index: 2, kind: input, shape index: {}]
  %s3 = inlined_call_operand.vmem [shape: bf16[128,4], index: 3, kind: input, shape index: {}]
  %s4 = inlined_call_operand.vmem [shape: f32[1,4], index: 4, kind: input, shape index: {}]
  %s5 = inlined_call_operand.vmem [shape: f32[2,16,4], index: 5, kind: output, shape index: {}]
  %s6 = sld [smem:[#allocation0]]
  $region30: #{tpu_custom_call.1} parent=0
    _
  %s8 = ssub.s32 1, %s6
  %s9 = scalar_select 0, %s8, %s6
  // Predicated region
  $region2: #{tpu_custom_call.1} parent=0 // pred_check
    _
  $region3: #{tpu_custom_call.1} parent=0 // pred_check_branch
    %11 = sbr.rel (0) target = $region5
  $region4: #{tpu_custom_call.1} parent=0 // pred_region
    _
  $region5: #{tpu_custom_call.1} parent=0 // pred_fallthru
    _
  // Predicated region
  $region6: #{tpu_custom_call.1} parent=0 // pred_check
    _
  $region7: #{tpu_custom_call.1} parent=0 // pred_check_branch
    %13 = sbr.rel (0) target = $region9
  $region8: #{tpu_custom_call.1} parent=0 // pred_region
    _
  $region9: #{tpu_custom_call.1} parent=0 // pred_fallthru
    _
  // Predicated region
  $region10: #{tpu_custom_call.1} parent=0 // pred_check
    _
  $region11: #{tpu_custom_call.1} parent=0 // pred_check_branch
    %15 = sbr.rel (0) target = $region13
  $region12: #{tpu_custom_call.1} parent=0 // pred_region
    _
  $region13: #{tpu_custom_call.1} parent=0 // pred_fallthru
    _
  // Predicated region
  $region14: #{tpu_custom_call.1} parent=0 // pred_check
    _
  $region15: #{tpu_custom_call.1} parent=0 // pred_check_branch
    %17 = sbr.rel (0) target = $region17
  $region16: #{tpu_custom_call.1} parent=0 // pred_region
    _
  $region17: #{tpu_custom_call.1} parent=0 // pred_fallthru
    _
  // Predicated region
  $region18: #{tpu_custom_call.1} parent=0 // pred_check
    _
  $region19: #{tpu_custom_call.1} parent=0 // pred_check_branch
    %19 = sbr.rel (0) target = $region21
  $region20: #{tpu_custom_call.1} parent=0 // pred_region
    _
  $region21: #{tpu_custom_call.1} parent=0 // pred_fallthru
    _
  %v21 = vld [vmem:[%s0] sm:$0xff]
  %v22 = vld [vmem:[%s0 + $0x8] sm:$0xff]
  %v23 = vld [vmem:[%s0 + $0x10] sm:$0xff]
  %v24 = vld [vmem:[%s0 + $0x18] sm:$0xff]
  %v25 = vpack.c.bf16 %v22, %v21
  %v26 = vpack.c.bf16 %v24, %v23
  %v27 = vld [vmem:[%s1] sm:$0x3f]
  %v28 = vld [vmem:[%s2] sm:$0x7]
  %v30 = vlaneseq
  %v31 = vshrl.u32 %v30, 7
  %v32 = vsub.s32 0, %v31
  %v33 = vrot.slane %v28, %v32
  %v34 = vlaneseq
  %v35 = vshrl.u32 %v34, 7
  %v36 = vsub.s32 1, %v35
  %v37 = vrot.slane %v28, %v36
  %v38 = vlaneseq
  %v39 = vshrl.u32 %v38, 7
  %v40 = vsub.s32 2, %v39
  %v41 = vrot.slane %v28, %v40
  %v46 = vcombine.high %v27, %v27
  %v48 = vunpack.c.l.s4 1983009808
  %v49 = vunpack.c.0.s8 %v48
  %v50 = vlaneseq
  %v51 = vshrl.u32 %v50, 7
  %v52 = vsub.s32 %v49, %v51
  %v53 = vrot.slane %v27, %v52
  %v55 = vunpack.c.l.s4 1983009808
  %v56 = vunpack.c.0.s8 %v55
  %v57 = vlaneseq
  %v58 = vshrl.u32 %v57, 7
  %v59 = vsub.s32 %v56, %v58
  %v60 = vrot.slane %v46, %v59
  %v61 = vcombine.high %v53, %v53
  %vm62 = vcmask 31744
  %v64 = vsel %vm62, %v25, 0
  %v67 = vsel %vm62, %v26, 0
  %vm69 = vcmask 1041408
  %v71 = vsel %vm69, %v53, 0
  %v74 = vsel %vm69, %v61, 0
  %v77 = vsel %vm69, %v60, 0
  %79 = vmatprep.subr.bf16.mxu0 %v74
  %80 = vmatpush1.bf16.msra.mxu0 %v71
  %81 = vmatprep.subr.bf16.mxu0 0
  %82 = vmatpush1.bf16.msra.mxu0 0
  %83 = vmatprep.subr.bf16.mxu0 0
  %84 = vmatpush1.bf16.msra.mxu0 0
  %85 = vmatprep.subr.bf16.mxu0 0
  %86 = vmatpush1.bf16.msra.mxu0 0
  %87 = vmatprep.subr.bf16.mxu0 0
  %88 = vmatpush1.bf16.msra.mxu0 0
  %89 = vmatprep.subr.bf16.mxu0 0
  %90 = vmatpush1.bf16.msra.mxu0 0
  %91 = vmatprep.subr.bf16.mxu0 0
  %92 = vmatpush1.bf16.msra.mxu0 0
  %93 = vmatprep.subr.bf16.mxu0 0
  %94 = vmatpush1.bf16.msra.mxu0 0
  %95 = vmatprep.subr.bf16.mxu0 0
  %96 = vmatpush1.bf16.msra.mxu0 0
  %97 = vmatprep.subr.bf16.mxu0 0
  %98 = vmatpush1.bf16.msra.mxu0 0
  %99 = vmatprep.subr.bf16.mxu0 0
  %100 = vmatpush1.bf16.msra.mxu0 0
  %101 = vmatprep.subr.bf16.mxu0 0
  %102 = vmatpush1.bf16.msra.mxu0 0
  %103 = vmatprep.subr.bf16.mxu0 0
  %104 = vmatpush1.bf16.msra.mxu0 0
  %105 = vmatprep.subr.bf16.mxu0 0
  %106 = vmatpush1.bf16.msra.mxu0 0
  %107 = vmatprep.subr.bf16.mxu0 0
  %108 = vmatpush1.bf16.msra.mxu0 0
  %109 = vmatprep.subr.bf16.mxu0 0
  %110 = vmatpush1.bf16.msra.mxu0 0
  %111 = vmatprep.mubr.bf16.mxu0 0
  %112 = vmatmul.mubr.bf16.gmra.mrb[0].mxu0 %v64
  %v113 = vpop.f32.mrb[0].mxu0
  %v114 = vadd.f32 %v33, %v113
  %v115 = vpop.f32.mrb[0].mxu0
  %v116 = vadd.f32 %v37, %v115
  %v117 = vpop.f32.mrb[0].mxu0
  %v118 = vadd.f32 %v33, %v117
  %v119 = vpop.f32.mrb[0].mxu0
  %v120 = vadd.f32 %v37, %v119
  %121 = vmatprep.mubr.bf16.mxu0 0
  %122 = vmatmul.mubr.bf16.gmra.mrb[0].mxu0 %v67
  %v123 = vpop.f32.mrb[0].mxu0
  %v124 = vadd.f32 %v33, %v123
  %v125 = vpop.f32.mrb[0].mxu0
  %v126 = vadd.f32 %v37, %v125
  %v127 = vpop.f32.mrb[0].mxu0
  %v128 = vadd.f32 %v33, %v127
  %v129 = vpop.f32.mrb[0].mxu0
  %v130 = vadd.f32 %v37, %v129
  %131 = vdwg.mxu0
  %132 = vmatprep.subr.bf16.mxu0 0
  %133 = vmatpush1.bf16.msra.mxu0 %v77
  %134 = vmatprep.subr.bf16.mxu0 0
  %135 = vmatpush1.bf16.msra.mxu0 0
  %136 = vmatprep.subr.bf16.mxu0 0
  %137 = vmatpush1.bf16.msra.mxu0 0
  %138 = vmatprep.subr.bf16.mxu0 0
  %139 = vmatpush1.bf16.msra.mxu0 0
  %140 = vmatprep.subr.bf16.mxu0 0
  %141 = vmatpush1.bf16.msra.mxu0 0
  %142 = vmatprep.subr.bf16.mxu0 0
  %143 = vmatpush1.bf16.msra.mxu0 0
  %144 = vmatprep.subr.bf16.mxu0 0
  %145 = vmatpush1.bf16.msra.mxu0 0
  %146 = vmatprep.subr.bf16.mxu0 0
  %147 = vmatpush1.bf16.msra.mxu0 0
  %148 = vmatprep.subr.bf16.mxu0 0
  %149 = vmatpush1.bf16.msra.mxu0 0
  %150 = vmatprep.subr.bf16.mxu0 0
  %151 = vmatpush1.bf16.msra.mxu0 0
  %152 = vmatprep.subr.bf16.mxu0 0
  %153 = vmatpush1.bf16.msra.mxu0 0
  %154 = vmatprep.subr.bf16.mxu0 0
  %155 = vmatpush1.bf16.msra.mxu0 0
  %156 = vmatprep.subr.bf16.mxu0 0
  %157 = vmatpush1.bf16.msra.mxu0 0
  %158 = vmatprep.subr.bf16.mxu0 0
  %159 = vmatpush1.bf16.msra.mxu0 0
  %160 = vmatprep.subr.bf16.mxu0 0
  %161 = vmatpush1.bf16.msra.mxu0 0
  %162 = vmatprep.subr.bf16.mxu0 0
  %163 = vmatpush1.bf16.msra.mxu0 0
  %164 = vmatprep.mubr.bf16.mxu0 0
  %165 = vmatmul.mubr.bf16.gmra.mrb[0].mxu0 %v64
  %v166 = vpop.f32.mrb[0].mxu0
  %v167 = vadd.f32 %v41, %v166
  %v168 = vpop.f32.mrb[0].mxu0
  %v169 = vpop.f32.mrb[0].mxu0
  %v170 = vadd.f32 %v41, %v169
  %v171 = vpop.f32.mrb[0].mxu0
  %172 = vmatprep.mubr.bf16.mxu0 0
  %173 = vmatmul.mubr.bf16.gmra.mrb[0].mxu0 %v67
  %v174 = vpop.f32.mrb[0].mxu0
  %v175 = vadd.f32 %v41, %v174
  %v176 = vpop.f32.mrb[0].mxu0
  %v177 = vpop.f32.mrb[0].mxu0
  %v178 = vadd.f32 %v41, %v177
  %v179 = vpop.f32.mrb[0].mxu0
  %180 = vdwg.mxu0
  %v181 = vpack.c.bf16 %v118, %v114
  %v182 = vpack.c.bf16 %v128, %v124
  %v183 = vpack.c.bf16 %v120, %v116
  %v184 = vpack.c.bf16 %v130, %v126
  %v185 = vpack.c.bf16 %v170, %v167
  %v186 = vpack.c.bf16 %v178, %v175
  %187 = vmatprep.subr.bf16.mxu0 0
  %188 = vmatpush1.bf16.xpose.msra.mxu0 %v183
  %189 = vmatprep.subr.bf16.mxu0 0
  %190 = vmatpush1.bf16.xpose.msra.mxu0 0
  %191 = vmatprep.subr.bf16.mxu0 0
  %192 = vmatpush1.bf16.xpose.msra.mxu0 0
  %193 = vmatprep.subr.bf16.mxu0 0
  %194 = vmatpush1.bf16.xpose.msra.mxu0 0
  %195 = vmatprep.subr.bf16.mxu0 0
  %196 = vmatpush1.bf16.xpose.msra.mxu0 0
  %197 = vmatprep.subr.bf16.mxu0 0
  %198 = vmatpush1.bf16.xpose.msra.mxu0 0
  %199 = vmatprep.subr.bf16.mxu0 0
  %200 = vmatpush1.bf16.xpose.msra.mxu0 0
  %201 = vmatprep.subr.bf16.mxu0 0
  %202 = vmatpush1.bf16.xpose.msra.mxu0 0
  %203 = vmatprep.subr.bf16.mxu0 0
  %204 = vmatpush1.bf16.xpose.msra.mxu0 0
  %205 = vmatprep.subr.bf16.mxu0 0
  %206 = vmatpush1.bf16.xpose.msra.mxu0 0
  %207 = vmatprep.subr.bf16.mxu0 0
  %208 = vmatpush1.bf16.xpose.msra.mxu0 0
  %209 = vmatprep.subr.bf16.mxu0 0
  %210 = vmatpush1.bf16.xpose.msra.mxu0 0
  %211 = vmatprep.subr.bf16.mxu0 0
  %212 = vmatpush1.bf16.xpose.msra.mxu0 0
  %213 = vmatprep.subr.bf16.mxu0 0
  %214 = vmatpush1.bf16.xpose.msra.mxu0 0
  %215 = vmatprep.subr.bf16.mxu0 0
  %216 = vmatpush1.bf16.xpose.msra.mxu0 0
  %217 = vmatprep.subr.bf16.mxu0 0
  %218 = vmatpush1.bf16.xpose.msra.mxu0 0
  %219 = vmatprep.mubr.bf16.mxu0 0
  %220 = vmatmul.mubr.bf16.gmra.mrb[0].mxu0 %v181
  %v221 = vpop.f32.mrb[0].mxu0
  %v222 = vadd.f32 0.0, %v221
  %v223 = vpop.f32.mrb[0].mxu0
  %v224 = vpop.f32.mrb[0].mxu0
  %v225 = vadd.f32 0.0, %v224
  %v226 = vpop.f32.mrb[0].mxu0
  %227 = vdwg.mxu0
  %228 = vmatprep.subr.bf16.mxu0 0
  %229 = vmatpush1.bf16.xpose.msra.mxu0 %v184
  %230 = vmatprep.subr.bf16.mxu0 0
  %231 = vmatpush1.bf16.xpose.msra.mxu0 0
  %232 = vmatprep.subr.bf16.mxu0 0
  %233 = vmatpush1.bf16.xpose.msra.mxu0 0
  %234 = vmatprep.subr.bf16.mxu0 0
  %235 = vmatpush1.bf16.xpose.msra.mxu0 0
  %236 = vmatprep.subr.bf16.mxu0 0
  %237 = vmatpush1.bf16.xpose.msra.mxu0 0
  %238 = vmatprep.subr.bf16.mxu0 0
  %239 = vmatpush1.bf16.xpose.msra.mxu0 0
  %240 = vmatprep.subr.bf16.mxu0 0
  %241 = vmatpush1.bf16.xpose.msra.mxu0 0
  %242 = vmatprep.subr.bf16.mxu0 0
  %243 = vmatpush1.bf16.xpose.msra.mxu0 0
  %244 = vmatprep.subr.bf16.mxu0 0
  %245 = vmatpush1.bf16.xpose.msra.mxu0 0
  %246 = vmatprep.subr.bf16.mxu0 0
  %247 = vmatpush1.bf16.xpose.msra.mxu0 0
  %248 = vmatprep.subr.bf16.mxu0 0
  %249 = vmatpush1.bf16.xpose.msra.mxu0 0
  %250 = vmatprep.subr.bf16.mxu0 0
  %251 = vmatpush1.bf16.xpose.msra.mxu0 0
  %252 = vmatprep.subr.bf16.mxu0 0
  %253 = vmatpush1.bf16.xpose.msra.mxu0 0
  %254 = vmatprep.subr.bf16.mxu0 0
  %255 = vmatpush1.bf16.xpose.msra.mxu0 0
  %256 = vmatprep.subr.bf16.mxu0 0
  %257 = vmatpush1.bf16.xpose.msra.mxu0 0
  %258 = vmatprep.subr.bf16.mxu0 0
  %259 = vmatpush1.bf16.xpose.msra.mxu0 0
  %260 = vmatprep.mubr.bf16.mxu0 0
  %261 = vmatmul.mubr.bf16.gmra.mrb[0].mxu0 %v182
  %v262 = vpop.f32.mrb[0].mxu0
  %v263 = vadd.f32 0.0, %v262
  %v264 = vpop.f32.mrb[0].mxu0
  %v265 = vpop.f32.mrb[0].mxu0
  %v266 = vadd.f32 0.0, %v265
  %v267 = vpop.f32.mrb[0].mxu0
  %268 = vdwg.mxu0
  %v269 = vmul.f32 %v222, 0.17677669
  %v270 = vmul.f32 %v225, 0.17677669
  %v271 = vmul.f32 %v263, 0.17677669
  %v272 = vmul.f32 %v266, 0.17677669
  %vm273 = vcmask 130048
  %v274 = vsel %vm273, %v269, -inf
  %275 = vmax.xlane.f32.xlu0 %v274
  %v276 = vpop.xlane.xlu0 %275
  %v277 = vsel %vm273, %v270, -inf
  %278 = vmax.xlane.f32.xlu0 %v277
  %v279 = vpop.xlane.xlu0 %278
  %v280 = vsel %vm273, %v271, -inf
  %281 = vmax.xlane.f32.xlu0 %v280
  %v282 = vpop.xlane.xlu0 %281
  %v283 = vsel %vm273, %v272, -inf
  %284 = vmax.xlane.f32.xlu0 %v283
  %v285 = vpop.xlane.xlu0 %284
  %v286 = vsub.f32 %v269, %v276
  %v287 = vsub.f32 %v270, %v279
  %v288 = vsub.f32 %v271, %v282
  %v289 = vsub.f32 %v272, %v285
  %v290 = vmul.f32 %v286, 1.442695
  %v291 = vpow.pop %v290
  %v292 = vmul.f32 %v287, 1.442695
  %v293 = vpow.pop %v292
  %v294 = vmul.f32 %v288, 1.442695
  %v295 = vpow.pop %v294
  %v296 = vmul.f32 %v289, 1.442695
  %v297 = vpow.pop %v296
  %v298 = vsel %vm273, %v291, 0.0
  %299 = vadd.xlane.f32.xlu0 %v298
  %v300 = vpop.xlane.xlu0 %299
  %v301 = vsel %vm273, %v293, 0.0
  %302 = vadd.xlane.f32.xlu0 %v301
  %v303 = vpop.xlane.xlu0 %302
  %v304 = vsel %vm273, %v295, 0.0
  %305 = vadd.xlane.f32.xlu0 %v304
  %v306 = vpop.xlane.xlu0 %305
  %v307 = vsel %vm273, %v297, 0.0
  %308 = vadd.xlane.f32.xlu0 %v307
  %v309 = vpop.xlane.xlu0 %308
  %v310 = vrcp.pop %v300
  %v311 = vrcp.pop %v303
  %v312 = vrcp.pop %v306
  %v313 = vrcp.pop %v309
  %v314 = vmul.f32 %v291, %v310
  %v315 = vmul.f32 %v293, %v311
  %v316 = vmul.f32 %v295, %v312
  %v317 = vmul.f32 %v297, %v313
  %v318 = vpack.c.bf16 %v315, %v314
  %v319 = vpack.c.bf16 %v317, %v316
  %v321 = vsel %vm273, %v318, 0
  %323 = vmatprep.subr.bf16.mxu0 0
  %324 = vmatpush1.bf16.msra.mxu0 %v185
  %325 = vmatprep.subr.bf16.mxu0 0
  %326 = vmatpush1.bf16.msra.mxu0 0
  %327 = vmatprep.subr.bf16.mxu0 0
  %328 = vmatpush1.bf16.msra.mxu0 0
  %329 = vmatprep.subr.bf16.mxu0 0
  %330 = vmatpush1.bf16.msra.mxu0 0
  %331 = vmatprep.subr.bf16.mxu0 0
  %332 = vmatpush1.bf16.msra.mxu0 0
  %333 = vmatprep.subr.bf16.mxu0 0
  %334 = vmatpush1.bf16.msra.mxu0 0
  %335 = vmatprep.subr.bf16.mxu0 0
  %336 = vmatpush1.bf16.msra.mxu0 0
  %337 = vmatprep.subr.bf16.mxu0 0
  %338 = vmatpush1.bf16.msra.mxu0 0
  %339 = vmatprep.subr.bf16.mxu0 0
  %340 = vmatpush1.bf16.msra.mxu0 0
  %341 = vmatprep.subr.bf16.mxu0 0
  %342 = vmatpush1.bf16.msra.mxu0 0
  %343 = vmatprep.subr.bf16.mxu0 0
  %344 = vmatpush1.bf16.msra.mxu0 0
  %345 = vmatprep.subr.bf16.mxu0 0
  %346 = vmatpush1.bf16.msra.mxu0 0
  %347 = vmatprep.subr.bf16.mxu0 0
  %348 = vmatpush1.bf16.msra.mxu0 0
  %349 = vmatprep.subr.bf16.mxu0 0
  %350 = vmatpush1.bf16.msra.mxu0 0
  %351 = vmatprep.subr.bf16.mxu0 0
  %352 = vmatpush1.bf16.msra.mxu0 0
  %353 = vmatprep.subr.bf16.mxu0 0
  %354 = vmatpush1.bf16.msra.mxu0 0
  %355 = vmatprep.mubr.bf16.mxu0 0
  %356 = vmatmul.mubr.bf16.gmra.mrb[0].mxu0 %v321
  %v357 = vpop.f32.mrb[0].mxu0
  %v358 = vadd.f32 0.0, %v357
  %v359 = vpop.f32.mrb[0].mxu0
  %v360 = vpop.f32.mrb[0].mxu0
  %v361 = vadd.f32 0.0, %v360
  %v362 = vpop.f32.mrb[0].mxu0
  %363 = vdwg.mxu0
  %v365 = vsel %vm273, %v319, 0
  %367 = vmatprep.subr.bf16.mxu0 0
  %368 = vmatpush1.bf16.msra.mxu0 %v186
  %369 = vmatprep.subr.bf16.mxu0 0
  %370 = vmatpush1.bf16.msra.mxu0 0
  %371 = vmatprep.subr.bf16.mxu0 0
  %372 = vmatpush1.bf16.msra.mxu0 0
  %373 = vmatprep.subr.bf16.mxu0 0
  %374 = vmatpush1.bf16.msra.mxu0 0
  %375 = vmatprep.subr.bf16.mxu0 0
  %376 = vmatpush1.bf16.msra.mxu0 0
  %377 = vmatprep.subr.bf16.mxu0 0
  %378 = vmatpush1.bf16.msra.mxu0 0
  %379 = vmatprep.subr.bf16.mxu0 0
  %380 = vmatpush1.bf16.msra.mxu0 0
  %381 = vmatprep.subr.bf16.mxu0 0
  %382 = vmatpush1.bf16.msra.mxu0 0
  %383 = vmatprep.subr.bf16.mxu0 0
  %384 = vmatpush1.bf16.msra.mxu0 0
  %385 = vmatprep.subr.bf16.mxu0 0
  %386 = vmatpush1.bf16.msra.mxu0 0
  %387 = vmatprep.subr.bf16.mxu0 0
  %388 = vmatpush1.bf16.msra.mxu0 0
  %389 = vmatprep.subr.bf16.mxu0 0
  %390 = vmatpush1.bf16.msra.mxu0 0
  %391 = vmatprep.subr.bf16.mxu0 0
  %392 = vmatpush1.bf16.msra.mxu0 0
  %393 = vmatprep.subr.bf16.mxu0 0
  %394 = vmatpush1.bf16.msra.mxu0 0
  %395 = vmatprep.subr.bf16.mxu0 0
  %396 = vmatpush1.bf16.msra.mxu0 0
  %397 = vmatprep.subr.bf16.mxu0 0
  %398 = vmatpush1.bf16.msra.mxu0 0
  %399 = vmatprep.mubr.bf16.mxu0 0
  %400 = vmatmul.mubr.bf16.gmra.mrb[0].mxu0 %v365
  %v401 = vpop.f32.mrb[0].mxu0
  %v402 = vadd.f32 0.0, %v401
  %v403 = vpop.f32.mrb[0].mxu0
  %v404 = vpop.f32.mrb[0].mxu0
  %v405 = vadd.f32 0.0, %v404
  %v406 = vpop.f32.mrb[0].mxu0
  %407 = vdwg.mxu0
  %v408 = vpack.c.bf16 %v361, %v358
  %v409 = vpack.c.bf16 %v405, %v402
  %v410 = vld [vmem:[%s3] sm:$0xf]
  %v411 = vld [vmem:[%s3 + $0x4] sm:$0xf]
  %v412 = vld [vmem:[%s3 + $0x8] sm:$0xf]
  %v413 = vld [vmem:[%s3 + $0xc] sm:$0xf]
  %v414 = vld [vmem:[%s3 + $0x10] sm:$0xf]
  %v415 = vld [vmem:[%s3 + $0x14] sm:$0xf]
  %v416 = vld [vmem:[%s3 + $0x18] sm:$0xf]
  %v417 = vld [vmem:[%s3 + $0x1c] sm:$0xf]
  %v418 = vld [vmem:[%s3 + $0x20] sm:$0xf]
  %v419 = vld [vmem:[%s3 + $0x24] sm:$0xf]
  %v420 = vld [vmem:[%s3 + $0x28] sm:$0xf]
  %v421 = vld [vmem:[%s3 + $0x2c] sm:$0xf]
  %v422 = vld [vmem:[%s3 + $0x30] sm:$0xf]
  %v423 = vld [vmem:[%s3 + $0x34] sm:$0xf]
  %v424 = vld [vmem:[%s3 + $0x38] sm:$0xf]
  %v425 = vld [vmem:[%s3 + $0x3c] sm:$0xf]
  %v426 = vld [vmem:[%s4] sm:$0x1]
  %v428 = vlaneseq
  %v429 = vshrl.u32 %v428, 7
  %v430 = vsub.s32 0, %v429
  %v431 = vrot.slane %v426, %v430
  %v449 = vunpack.c.l.b16 %v410
  %v450 = vunpack.c.l.b16 %v411
  %v451 = vunpack.c.l.b16 %v412
  %v452 = vunpack.c.l.b16 %v413
  %v453 = vunpack.c.l.b16 %v414
  %v454 = vunpack.c.l.b16 %v415
  %v455 = vunpack.c.l.b16 %v416
  %v456 = vunpack.c.l.b16 %v417
  %v457 = vunpack.c.l.b16 %v418
  %v458 = vunpack.c.l.b16 %v419
  %v459 = vunpack.c.l.b16 %v420
  %v460 = vunpack.c.l.b16 %v421
  %v461 = vunpack.c.l.b16 %v422
  %v462 = vunpack.c.l.b16 %v423
  %v463 = vunpack.c.l.b16 %v424
  %v464 = vunpack.c.l.b16 %v425
  %v465 = vpack.c.b16 %v450, %v449
  %v466 = vpack.c.b16 %v452, %v451
  %v467 = vpack.c.b16 %v454, %v453
  %v468 = vpack.c.b16 %v456, %v455
  %v469 = vpack.c.b16 %v458, %v457
  %v470 = vpack.c.b16 %v460, %v459
  %v471 = vpack.c.b16 %v462, %v461
  %v472 = vpack.c.b16 %v464, %v463
  %481 = vmatprep.subr.bf16.mxu0 0
  %482 = vmatpush1.bf16.msra.mxu0 %v465
  %483 = vmatprep.subr.bf16.mxu0 0
  %484 = vmatpush1.bf16.msra.mxu0 %v466
  %485 = vmatprep.subr.bf16.mxu0 0
  %486 = vmatpush1.bf16.msra.mxu0 %v467
  %487 = vmatprep.subr.bf16.mxu0 0
  %488 = vmatpush1.bf16.msra.mxu0 %v468
  %489 = vmatprep.subr.bf16.mxu0 0
  %490 = vmatpush1.bf16.msra.mxu0 %v469
  %491 = vmatprep.subr.bf16.mxu0 0
  %492 = vmatpush1.bf16.msra.mxu0 %v470
  %493 = vmatprep.subr.bf16.mxu0 0
  %494 = vmatpush1.bf16.msra.mxu0 %v471
  %495 = vmatprep.subr.bf16.mxu0 0
  %496 = vmatpush1.bf16.msra.mxu0 %v472
  %497 = vmatprep.subr.bf16.mxu0 0
  %498 = vmatpush1.bf16.msra.mxu0 0
  %499 = vmatprep.subr.bf16.mxu0 0
  %500 = vmatpush1.bf16.msra.mxu0 0
  %501 = vmatprep.subr.bf16.mxu0 0
  %502 = vmatpush1.bf16.msra.mxu0 0
  %503 = vmatprep.subr.bf16.mxu0 0
  %504 = vmatpush1.bf16.msra.mxu0 0
  %505 = vmatprep.subr.bf16.mxu0 0
  %506 = vmatpush1.bf16.msra.mxu0 0
  %507 = vmatprep.subr.bf16.mxu0 0
  %508 = vmatpush1.bf16.msra.mxu0 0
  %509 = vmatprep.subr.bf16.mxu0 0
  %510 = vmatpush1.bf16.msra.mxu0 0
  %511 = vmatprep.subr.bf16.mxu0 0
  %512 = vmatpush1.bf16.msra.mxu0 0
  %513 = vmatprep.mubr.bf16.mxu0 0
  %514 = vmatmul.mubr.bf16.gmra.mrb[0].mxu0 %v408
  %v515 = vpop.f32.mrb[0].mxu0
  %v516 = vadd.f32 %v431, %v515
  %v517 = vpop.f32.mrb[0].mxu0
  %v518 = vpop.f32.mrb[0].mxu0
  %v519 = vadd.f32 %v431, %v518
  %v520 = vpop.f32.mrb[0].mxu0
  %521 = vmatprep.mubr.bf16.mxu0 0
  %522 = vmatmul.mubr.bf16.gmra.mrb[0].mxu0 %v409
  %v523 = vpop.f32.mrb[0].mxu0
  %v524 = vadd.f32 %v431, %v523
  %v525 = vpop.f32.mrb[0].mxu0
  %v526 = vpop.f32.mrb[0].mxu0
  %v527 = vadd.f32 %v431, %v526
  %v528 = vpop.f32.mrb[0].mxu0
  %529 = vdwg.mxu0
  %v530 = vadd.f32 %v516, %v21
  %v531 = vadd.f32 %v519, %v22
  %v532 = vadd.f32 %v524, %v23
  %v533 = vadd.f32 %v527, %v24
  %534 = vst.msk [vmem:[%s5] sm:$0xff] %vm62, %v530
  %535 = vst.msk [vmem:[%s5 + $0x8] sm:$0xff] %vm62, %v531
  %536 = vst.msk [vmem:[%s5 + $0x10] sm:$0xff] %vm62, %v532
  %537 = vst.msk [vmem:[%s5 + $0x18] sm:$0xff] %vm62, %v533
  // Predicated region
  $region22: #{tpu_custom_call.1} parent=0 // pred_check
    _
  $region23: #{tpu_custom_call.1} parent=0 // pred_check_branch
    %539 = sbr.rel (0) target = $region25
  $region24: #{tpu_custom_call.1} parent=0 // pred_region
    _
  $region25: #{tpu_custom_call.1} parent=0 // pred_fallthru
    _
  // Predicated region
  $region26: #{tpu_custom_call.1} parent=0 // pred_check
    _
  $region27: #{tpu_custom_call.1} parent=0 // pred_check_branch
    %541 = sbr.rel (0) target = $region29
  $region28: #{tpu_custom_call.1} parent=0 // pred_region
    _
  $region29: #{tpu_custom_call.1} parent=0 // pred_fallthru
    _

</llo_original>
